<compile_context>
chip_gen: v5e
topology: v5e:2x2
jax: 0.10.0
libtpu: 0.0.40
codegen_flags: <defaults>
</compile_context>

<pallas_src>
import functools

import jax
import jax.numpy as jnp
from jax.experimental import pallas as pl
from jax.experimental.pallas import tpu as pltpu


def _round_up(n, m):
    return ((n + m - 1) // m) * m


def _actor_critic_kernel(xt_ref, w1t_ref, w2t_ref, wht_ref, b_ref, out_ref,
                         *, in_size, out_size, head_rows):
    """One batch tile, batch on lanes: x^T[in, TB] -> out[head_rows, TB]."""
    xt = xt_ref[...]                                   # [in, TB]
    b1 = b_ref[:, 0:1]                                 # [hidden, 1]
    b2 = b_ref[:, 1:2]                                 # [hidden, 1]
    bh = b_ref[:head_rows, 2:3]                        # [head_rows, 1]

    # Layer 1: contraction depth is only `in_size` (=4) -> 4 VPU broadcast-FMAs
    # instead of a badly shaped MXU matmul.
    h1 = w1t_ref[:, 0:1] * xt[0:1, :]
    for k in range(1, in_size):                        # tiny static unrolled loop
        h1 = h1 + w1t_ref[:, k:k + 1] * xt[k:k + 1, :]
    h1 = jnp.maximum(h1 + b1, 0.0)                     # [hidden, TB]

    # Layer 2: proper MXU matmul (K = 64).
    h2 = jnp.dot(w2t_ref[...], h1, preferred_element_type=jnp.float32) + b2
    h2 = jnp.maximum(h2, 0.0)                          # [hidden, TB]

    # Fused actor|critic head: rows 0..out-1 = actor logits, row out = value.
    logits = jnp.dot(wht_ref[...], h2, preferred_element_type=jnp.float32) + bh

    # Softmax over the actor rows only (axis 0); value row passes through raw.
    row = jax.lax.broadcasted_iota(jnp.int32, logits.shape, 0)
    is_actor = row < out_size
    masked = jnp.where(is_actor, logits, -jnp.inf)
    m = jnp.max(masked, axis=0, keepdims=True)         # [1, TB]
    e = jnp.exp(masked - m)                            # exp(-inf) == 0 on non-actor rows
    denom = jnp.sum(e, axis=0, keepdims=True)          # [1, TB]
    policy = e * (1.0 / denom)                         # exact divide (fixes sum-to-1)

    # Padded batch columns (cols >= real B) carry bias-only math; the wrapper
    # slices them away, so they are benign.
    out_ref[...] = jnp.where(is_actor, policy,
                             jnp.where(row == out_size, logits, 0.0))


def pack_params(params):
    """One-time (per optimizer step) packing into kernel-ready arrays."""
    f32 = jnp.float32
    w1 = params["w1"].astype(f32)                      # [in, hidden]
    w2 = params["w2"].astype(f32)                      # [hidden, hidden]
    wa = params["wa"].astype(f32)                      # [hidden, out]
    wc = params["wc"].astype(f32)                      # [hidden, 1]
    in_size, hidden = w1.shape
    out_size = wa.shape[1]
    head_rows = _round_up(out_size + 1, 8)             # sublane-aligned fused head
    assert out_size + 1 <= hidden, "bias packing assumes head fits in hidden rows"

    # Fused actor|critic head weights (transposed), zero-padded to head_rows.
    wht = jnp.zeros((head_rows, hidden), f32)
    wht = wht.at[:out_size, :].set(wa.T)
    wht = wht.at[out_size, :].set(wc[:, 0])

    # All biases packed into one small [hidden, 3] argument (fewer tiny DMAs).
    biases = jnp.zeros((hidden, 3), f32)
    biases = biases.at[:, 0].set(params["b1"].astype(f32))
    biases = biases.at[:, 1].set(params["b2"].astype(f32))
    biases = biases.at[:out_size, 2].set(params["ba"].astype(f32))
    biases = biases.at[out_size, 2].set(params["bc"].astype(f32)[0])

    return dict(w1t=w1.T, w2t=w2.T, wht=wht, biases=biases,
                in_size=in_size, hidden=hidden,
                out_size=out_size, head_rows=head_rows)


def actor_critic_forward(x, packed, *, max_tile=1024, single_tile_max=2048):
    """x: [B, input_size] f32, packed: output of pack_params.

    Returns (policy [B, out_size], value [B, 1]).
    """
    f32 = jnp.float32
    B, in_size = x.shape
    assert in_size == packed["in_size"]
    hidden = packed["hidden"]
    out_size = packed["out_size"]
    head_rows = packed["head_rows"]

    # ---- batch tile selection (batch lives on the 128-lane axis) ----
    Bp128 = _round_up(B, 128)
    if Bp128 <= single_tile_max:
        TB = Bp128                                     # one grid step for small B
    else:
        TB = max_tile
        g = _round_up(B, TB) // TB
        half = TB // 2
        # v7x: prefer an even tile count so both TensorCores get equal work.
        if g > 1 and g % 2 == 1 and half >= 128 and half % 128 == 0:
            if (_round_up(B, half) // half) % 2 == 0:
                TB = half
    Bp = _round_up(B, TB)
    grid = (Bp // TB,)

    xt = x.astype(f32).T                               # [in, B]  lane-dense read
    if Bp != B:
        xt = jnp.pad(xt, ((0, 0), (0, Bp - B)))

    kernel = functools.partial(_actor_critic_kernel, in_size=in_size,
                               out_size=out_size, head_rows=head_rows)

    flops = 2 * Bp * (in_size * hidden + hidden * hidden + hidden * head_rows)
    bytes_accessed = 4 * (in_size * Bp + hidden * in_size + hidden * hidden
                          + head_rows * hidden + hidden * 3 + head_rows * Bp)

    out = pl.pallas_call(
        kernel,
        out_shape=jax.ShapeDtypeStruct((head_rows, Bp), f32),
        grid=grid,
        in_specs=[
            pl.BlockSpec((in_size, TB), lambda i: (0, i)),        # x^T, batch-tiled
            pl.BlockSpec((hidden, in_size), lambda i: (0, 0)),    # W1^T resident
            pl.BlockSpec((hidden, hidden), lambda i: (0, 0)),     # W2^T resident
            pl.BlockSpec((head_rows, hidden), lambda i: (0, 0)),  # fused head W^T
            pl.BlockSpec((hidden, 3), lambda i: (0, 0)),          # packed biases
        ],
        out_specs=pl.BlockSpec((head_rows, TB), lambda i: (0, i)),  # [8, Bp] slab
        compiler_params=pltpu.CompilerParams(
            dimension_semantics=("parallel",)),                   # megacore split
        cost_estimate=pl.CostEstimate(
            flops=flops,
            transcendentals=Bp * head_rows,
            bytes_accessed=bytes_accessed),
    )(xt, packed["w1t"], packed["w2t"], packed["wht"], packed["biases"])

    policy = out[:out_size, :B].T                      # [B, out_size]
    value = out[out_size:out_size + 1, :B].T           # [B, 1]
    return policy, value


def init_params(key, input_size, output_size, hidden=64):
    """Deterministic synthetic init matching the nn.Linear layer shapes."""
    ks = jax.random.split(key, 8)

    def lin(kw, kb, fan_in, fan_out):
        bound = 1.0 / jnp.sqrt(jnp.float32(fan_in))
        w = jax.random.uniform(kw, (fan_in, fan_out), jnp.float32, -bound, bound)
        b = jax.random.uniform(kb, (fan_out,), jnp.float32, -bound, bound)
        return w, b

    w1, b1 = lin(ks[0], ks[1], input_size, hidden)
    w2, b2 = lin(ks[2], ks[3], hidden, hidden)
    wa, ba = lin(ks[4], ks[5], hidden, output_size)
    wc, bc = lin(ks[6], ks[7], hidden, 1)
    return dict(w1=w1, b1=b1, w2=w2, b2=b2, wa=wa, ba=ba, wc=wc, bc=bc)


def reference_forward(x, params):
    """Pure-JAX reference identical to the PyTorch module."""
    h1 = jnp.maximum(x @ params["w1"] + params["b1"], 0.0)
    h2 = jnp.maximum(h1 @ params["w2"] + params["b2"], 0.0)
    policy = jax.nn.softmax(h2 @ params["wa"] + params["ba"], axis=-1)
    value = h2 @ params["wc"] + params["bc"]
    return policy, value


if __name__ == "__main__":
    key = jax.random.PRNGKey(0)
    k_param, k_x, k_x2 = jax.random.split(key, 3)

    input_size = 4    # CartPole observation dim
    output_size = 2   # CartPole action dim
    batch = 37        # small, non-multiple of 8/128 -> exercises batch padding

    params = init_params(k_param, input_size, output_size)
    packed = pack_params(params)       # packing hoisted out of the hot path
    x = jax.random.normal(k_x, (batch, input_size), jnp.float32)

    policy, value = actor_critic_forward(x, packed)
    policy = jax.block_until_ready(policy)
    value = jax.block_until_ready(value)
    assert policy.shape == (batch, output_size)
    assert value.shape == (batch, 1)

    ref_policy, ref_value = reference_forward(x, params)
    assert bool(jnp.allclose(jnp.sum(policy, axis=-1), 1.0, atol=1e-3))
    assert bool(jnp.allclose(policy, ref_policy, atol=1e-3, rtol=1e-3))
    assert bool(jnp.allclose(value, ref_value, atol=1e-3, rtol=1e-3))

    # Also exercise the multi-tile grid path (forced 128-wide tiles, 3 steps).
    x2 = jax.random.normal(k_x2, (300, input_size), jnp.float32)
    p2, v2 = actor_critic_forward(x2, packed, max_tile=128, single_tile_max=0)
    p2 = jax.block_until_ready(p2)
    v2 = jax.block_until_ready(v2)
    rp2, rv2 = reference_forward(x2, params)
    assert p2.shape == (300, output_size) and v2.shape == (300, 1)
    assert bool(jnp.allclose(p2, rp2, atol=1e-3, rtol=1e-3))
    assert bool(jnp.allclose(v2, rv2, atol=1e-3, rtol=1e-3))

    print("KERNEL_OK")
</pallas_src>

<mosaic_0001>
module attributes {stable_mosaic.version = 11 : i64} {
  func.func @_actor_critic_kernel(%arg0: i32, %arg1: memref<4x128xf32, #tpu.memory_space<vmem>>, %arg2: memref<64x4xf32, #tpu.memory_space<vmem>>, %arg3: memref<64x64xf32, #tpu.memory_space<vmem>>, %arg4: memref<8x64xf32, #tpu.memory_space<vmem>>, %arg5: memref<64x3xf32, #tpu.memory_space<vmem>>, %arg6: memref<8x128xf32, #tpu.memory_space<vmem>>) attributes {dimension_semantics = [#tpu.dimension_semantics<parallel>], iteration_bounds = array<i64: 1>, scalar_prefetch = 0 : i64, scratch_operands = 0 : i64, tpu.core_type = #tpu.core_type<tc>, window_params = [{transform_indices = @transform_0, window_bounds = array<i64: 4, 128>}, {pipeline_mode = #tpu.pipeline_mode<synchronous>, transform_indices = @transform_1, window_bounds = array<i64: 64, 4>}, {pipeline_mode = #tpu.pipeline_mode<synchronous>, transform_indices = @transform_2, window_bounds = array<i64: 64, 64>}, {pipeline_mode = #tpu.pipeline_mode<synchronous>, transform_indices = @transform_3, window_bounds = array<i64: 8, 64>}, {pipeline_mode = #tpu.pipeline_mode<synchronous>, transform_indices = @transform_4, window_bounds = array<i64: 64, 3>}, {transform_indices = @transform_5, window_bounds = array<i64: 8, 128>}]} {
    %c0 = arith.constant 0 : index
    %c0_0 = arith.constant 0 : index
    %0 = vector.load %arg1[%c0, %c0_0] : memref<4x128xf32, #tpu.memory_space<vmem>>, vector<4x128xf32>
    %c0_1 = arith.constant 0 : index
    %c0_2 = arith.constant 0 : index
    %1 = vector.load %arg5[%c0_1, %c0_2] : memref<64x3xf32, #tpu.memory_space<vmem>>, vector<64x1xf32>
    %c0_3 = arith.constant 0 : index
    %c1 = arith.constant 1 : index
    %2 = vector.load %arg5[%c0_3, %c1] : memref<64x3xf32, #tpu.memory_space<vmem>>, vector<64x1xf32>
    %c0_4 = arith.constant 0 : index
    %c2 = arith.constant 2 : index
    %3 = vector.load %arg5[%c0_4, %c2] : memref<64x3xf32, #tpu.memory_space<vmem>>, vector<8x1xf32>
    %c0_5 = arith.constant 0 : index
    %c0_6 = arith.constant 0 : index
    %4 = vector.load %arg2[%c0_5, %c0_6] : memref<64x4xf32, #tpu.memory_space<vmem>>, vector<64x1xf32>
    %5 = vector.extract_strided_slice %0 {offsets = [0, 0], sizes = [1, 128], strides = [1, 1]} : vector<4x128xf32> to vector<1x128xf32>
    %6 = vector.broadcast %4 : vector<64x1xf32> to vector<64x128xf32>
    %7 = vector.broadcast %5 : vector<1x128xf32> to vector<64x128xf32>
    %8 = arith.mulf %6, %7 : vector<64x128xf32>
    %c0_7 = arith.constant 0 : index
    %c1_8 = arith.constant 1 : index
    %9 = vector.load %arg2[%c0_7, %c1_8] : memref<64x4xf32, #tpu.memory_space<vmem>>, vector<64x1xf32>
    %10 = vector.extract_strided_slice %0 {offsets = [1, 0], sizes = [1, 128], strides = [1, 1]} : vector<4x128xf32> to vector<1x128xf32>
    %11 = vector.broadcast %9 : vector<64x1xf32> to vector<64x128xf32>
    %12 = vector.broadcast %10 : vector<1x128xf32> to vector<64x128xf32>
    %13 = arith.mulf %11, %12 : vector<64x128xf32>
    %14 = arith.addf %8, %13 : vector<64x128xf32>
    %c0_9 = arith.constant 0 : index
    %c2_10 = arith.constant 2 : index
    %15 = vector.load %arg2[%c0_9, %c2_10] : memref<64x4xf32, #tpu.memory_space<vmem>>, vector<64x1xf32>
    %16 = vector.extract_strided_slice %0 {offsets = [2, 0], sizes = [1, 128], strides = [1, 1]} : vector<4x128xf32> to vector<1x128xf32>
    %17 = vector.broadcast %15 : vector<64x1xf32> to vector<64x128xf32>
    %18 = vector.broadcast %16 : vector<1x128xf32> to vector<64x128xf32>
    %19 = arith.mulf %17, %18 : vector<64x128xf32>
    %20 = arith.addf %14, %19 : vector<64x128xf32>
    %c0_11 = arith.constant 0 : index
    %c3 = arith.constant 3 : index
    %21 = vector.load %arg2[%c0_11, %c3] : memref<64x4xf32, #tpu.memory_space<vmem>>, vector<64x1xf32>
    %22 = vector.extract_strided_slice %0 {offsets = [3, 0], sizes = [1, 128], strides = [1, 1]} : vector<4x128xf32> to vector<1x128xf32>
    %23 = vector.broadcast %21 : vector<64x1xf32> to vector<64x128xf32>
    %24 = vector.broadcast %22 : vector<1x128xf32> to vector<64x128xf32>
    %25 = arith.mulf %23, %24 : vector<64x128xf32>
    %26 = arith.addf %20, %25 : vector<64x128xf32>
    %27 = vector.broadcast %1 : vector<64x1xf32> to vector<64x128xf32>
    %28 = arith.addf %26, %27 : vector<64x128xf32>
    %cst = arith.constant 0.000000e+00 : f32
    %29 = vector.broadcast %cst : f32 to vector<64x128xf32>
    %30 = arith.maximumf %28, %29 : vector<64x128xf32>
    %c0_12 = arith.constant 0 : index
    %c0_13 = arith.constant 0 : index
    %31 = vector.load %arg3[%c0_12, %c0_13] : memref<64x64xf32, #tpu.memory_space<vmem>>, vector<64x64xf32>
    %cst_14 = arith.constant dense<0.000000e+00> : vector<64x128xf32>
    %32 = tpu.matmul %31, %30, %cst_14 {dimension_numbers = #tpu.dot_dimension_numbers<[1], [0], [0], [1], [0, 0, 1, 1], [], []>} : vector<64x64xf32>, vector<64x128xf32>, vector<64x128xf32> -> vector<64x128xf32>
    %33 = vector.broadcast %2 : vector<64x1xf32> to vector<64x128xf32>
    %34 = arith.addf %32, %33 : vector<64x128xf32>
    %cst_15 = arith.constant 0.000000e+00 : f32
    %35 = vector.broadcast %cst_15 : f32 to vector<64x128xf32>
    %36 = arith.maximumf %34, %35 : vector<64x128xf32>
    %c0_16 = arith.constant 0 : index
    %c0_17 = arith.constant 0 : index
    %37 = vector.load %arg4[%c0_16, %c0_17] : memref<8x64xf32, #tpu.memory_space<vmem>>, vector<8x64xf32>
    %cst_18 = arith.constant dense<0.000000e+00> : vector<8x128xf32>
    %38 = tpu.matmul %37, %36, %cst_18 {dimension_numbers = #tpu.dot_dimension_numbers<[1], [0], [0], [1], [0, 0, 1, 1], [], []>} : vector<8x64xf32>, vector<64x128xf32>, vector<8x128xf32> -> vector<8x128xf32>
    %39 = vector.broadcast %3 : vector<8x1xf32> to vector<8x128xf32>
    %40 = arith.addf %38, %39 : vector<8x128xf32>
    %41 = tpu.iota {dimensions = array<i32: 0>} : vector<8x128xi32>
    %c2_i32 = arith.constant 2 : i32
    %42 = vector.broadcast %c2_i32 : i32 to vector<8x128xi32>
    %43 = arith.cmpi slt, %41, %42 : vector<8x128xi32>
    %cst_19 = arith.constant 0xFF800000 : f32
    %44 = vector.broadcast %cst_19 : f32 to vector<8x128xf32>
    %45 = arith.select %43, %40, %44 : vector<8x128xi1>, vector<8x128xf32>
    %cst_20 = arith.constant dense<0xFF800000> : vector<128xf32>
    %46 = vector.multi_reduction <maximumf>, %45, %cst_20 [0] : vector<8x128xf32> to vector<128xf32>
    %47 = vector.shape_cast %46 : vector<128xf32> to vector<1x128xf32>
    %48 = vector.broadcast %47 : vector<1x128xf32> to vector<8x128xf32>
    %49 = arith.subf %45, %48 : vector<8x128xf32>
    %50 = math.exp %49 : vector<8x128xf32>
    %cst_21 = arith.constant dense<0.000000e+00> : vector<128xf32>
    %51 = vector.multi_reduction <add>, %50, %cst_21 [0] : vector<8x128xf32> to vector<128xf32>
    %52 = vector.shape_cast %51 : vector<128xf32> to vector<1x128xf32>
    %cst_22 = arith.constant 1.000000e+00 : f32
    %53 = vector.broadcast %cst_22 : f32 to vector<1x128xf32>
    %54 = arith.divf %53, %52 : vector<1x128xf32>
    %55 = vector.broadcast %54 : vector<1x128xf32> to vector<8x128xf32>
    %56 = arith.mulf %50, %55 : vector<8x128xf32>
    %c2_i32_23 = arith.constant 2 : i32
    %57 = vector.broadcast %c2_i32_23 : i32 to vector<8x128xi32>
    %58 = arith.cmpi eq, %41, %57 : vector<8x128xi32>
    %cst_24 = arith.constant 0.000000e+00 : f32
    %59 = vector.broadcast %cst_24 : f32 to vector<8x128xf32>
    %60 = arith.select %58, %40, %59 : vector<8x128xi1>, vector<8x128xf32>
    %61 = arith.select %43, %56, %60 : vector<8x128xi1>, vector<8x128xf32>
    %c0_25 = arith.constant 0 : index
    %c0_26 = arith.constant 0 : index
    %62 = vector.load %arg6[%c0_25, %c0_26] : memref<8x128xf32, #tpu.memory_space<vmem>>, vector<8x128xf32>
    tpu.vector_store %arg6[%c0_25, %c0_26], %61 {strides = array<i32>} : memref<8x128xf32, #tpu.memory_space<vmem>>, vector<8x128xf32>,
    return
  }
  func.func @transform_0(%arg0: i32) -> (i32, i32) {
    %c0_i32 = arith.constant 0 : i32
    %c0_i32_0 = arith.constant 0 : i32
    return %c0_i32, %arg0 : i32, i32
  }
  func.func @transform_1(%arg0: i32) -> (i32, i32) {
    %c0_i32 = arith.constant 0 : i32
    %c0_i32_0 = arith.constant 0 : i32
    %c0_i32_1 = arith.constant 0 : i32
    return %c0_i32, %c0_i32_0 : i32, i32
  }
  func.func @transform_2(%arg0: i32) -> (i32, i32) {
    %c0_i32 = arith.constant 0 : i32
    %c0_i32_0 = arith.constant 0 : i32
    %c0_i32_1 = arith.constant 0 : i32
    return %c0_i32, %c0_i32_0 : i32, i32
  }
  func.func @transform_3(%arg0: i32) -> (i32, i32) {
    %c0_i32 = arith.constant 0 : i32
    %c0_i32_0 = arith.constant 0 : i32
    %c0_i32_1 = arith.constant 0 : i32
    return %c0_i32, %c0_i32_0 : i32, i32
  }
  func.func @transform_4(%arg0: i32) -> (i32, i32) {
    %c0_i32 = arith.constant 0 : i32
    %c0_i32_0 = arith.constant 0 : i32
    %c0_i32_1 = arith.constant 0 : i32
    return %c0_i32, %c0_i32_0 : i32, i32
  }
  func.func @transform_5(%arg0: i32) -> (i32, i32) {
    %c0_i32 = arith.constant 0 : i32
    %c0_i32_0 = arith.constant 0 : i32
    return %c0_i32, %arg0 : i32, i32
  }
}

</mosaic_0001>

<llo_original>
// kernel: tpu_custom_call.1
$region0: #{tpu_custom_call.1}
  #allocation0 [shape = 'u32[]', space=smem, size = 0x4, offset = 0x4, fixed_abs, tag = 'smem constant byte address 0x4 - core index']
  #allocation1 [shape = 'u32[72,128]{1,0:T(1,128)}', space=vmem, size = 0x9000, scoped, tag = 'internal scratch']
  %s0 = inlined_call_operand.vmem [shape: f32[4,128], index: 0, kind: input, shape index: {}]
  %s1 = inlined_call_operand.vmem [shape: f32[64,4], index: 1, kind: input, shape index: {}]
  %s2 = inlined_call_operand.vmem [shape: f32[64,64], index: 2, kind: input, shape index: {}]
  %s3 = inlined_call_operand.vmem [shape: f32[8,64], index: 3, kind: input, shape index: {}]
  %s4 = inlined_call_operand.vmem [shape: f32[64,3], index: 4, kind: input, shape index: {}]
  %s5 = inlined_call_operand.hbm [shape: f32[8,128], index: 5, kind: output, shape index: {}]
  %s6 = sld [smem:[#allocation0]]
  $region30: #{tpu_custom_call.1} parent=0
    _
  %s8 = ssub.s32 1, %s6
  %s9 = scalar_select 0, %s8, %s6
  $region1: #{tpu_custom_call.1} parent=0
    #allocation2 [shape = 'u8[4096]{0}', space=vmem, size = 0x1000, scoped, tag = 'output window, operand 0, single buffered']
    #allocation3 [shape = 's32[1]{0}', space=sflag, size = 0x4, scoped, tag = 'scoped memory for tpu_custom_call.1']
    %10 = vsyncpa [#allocation3], 0
    // Predicated region
    $region2: #{tpu_custom_call.1} parent=1 // pred_check
      _
    $region3: #{tpu_custom_call.1} parent=1 // pred_check_branch
      %12 = sbr.rel (0) target = $region5
    $region4: #{tpu_custom_call.1} parent=1 // pred_region
      _
    $region5: #{tpu_custom_call.1} parent=1 // pred_fallthru
      _
    // Predicated region
    $region6: #{tpu_custom_call.1} parent=1 // pred_check
      _
    $region7: #{tpu_custom_call.1} parent=1 // pred_check_branch
      %14 = sbr.rel (0) target = $region9
    $region8: #{tpu_custom_call.1} parent=1 // pred_region
      _
    $region9: #{tpu_custom_call.1} parent=1 // pred_fallthru
      _
    // Predicated region
    $region10: #{tpu_custom_call.1} parent=1 // pred_check
      _
    $region11: #{tpu_custom_call.1} parent=1 // pred_check_branch
      %16 = sbr.rel (0) target = $region13
    $region12: #{tpu_custom_call.1} parent=1 // pred_region
      _
    $region13: #{tpu_custom_call.1} parent=1 // pred_fallthru
      _
    // Predicated region
    $region14: #{tpu_custom_call.1} parent=1 // pred_check
      _
    $region15: #{tpu_custom_call.1} parent=1 // pred_check_branch
      %18 = sbr.rel (0) target = $region17
    $region16: #{tpu_custom_call.1} parent=1 // pred_region
      _
    $region17: #{tpu_custom_call.1} parent=1 // pred_fallthru
      _
    // Predicated region
    $region18: #{tpu_custom_call.1} parent=1 // pred_check
      _
    $region19: #{tpu_custom_call.1} parent=1 // pred_check_branch
      %20 = sbr.rel (0) target = $region21
    $region20: #{tpu_custom_call.1} parent=1 // pred_region
      _
    $region21: #{tpu_custom_call.1} parent=1 // pred_fallthru
      _
    %v21 = vld [vmem:[%s0] sm:$0xf]
    %v22 = vld [vmem:[%s4] sm:$0xff]
    %v23 = vld [vmem:[%s4 + $0x8] sm:$0xff]
    %v24 = vld [vmem:[%s4 + $0x10] sm:$0xff]
    %v25 = vld [vmem:[%s4 + $0x18] sm:$0xff]
    %v26 = vld [vmem:[%s4 + $0x20] sm:$0xff]
    %v27 = vld [vmem:[%s4 + $0x28] sm:$0xff]
    %v28 = vld [vmem:[%s4 + $0x30] sm:$0xff]
    %v29 = vld [vmem:[%s4 + $0x38] sm:$0xff]
    %v30 = vld [vmem:[%s1] sm:$0xff]
    %v31 = vld [vmem:[%s1 + $0x8] sm:$0xff]
    %v32 = vld [vmem:[%s1 + $0x10] sm:$0xff]
    %v33 = vld [vmem:[%s1 + $0x18] sm:$0xff]
    %v34 = vld [vmem:[%s1 + $0x20] sm:$0xff]
    %v35 = vld [vmem:[%s1 + $0x28] sm:$0xff]
    %v36 = vld [vmem:[%s1 + $0x30] sm:$0xff]
    %v37 = vld [vmem:[%s1 + $0x38] sm:$0xff]
    %39 = vset.pattern.permute.xlu0 0
    %40 = vperm.xlu0 %39, %v30
    %v41 = vpop.permute.xlu0 %40
    %44 = vset.pattern.permute.xlu0 0
    %45 = vperm.xlu0 %44, %v31
    %v46 = vpop.permute.xlu0 %45
    %49 = vset.pattern.permute.xlu0 0
    %50 = vperm.xlu0 %49, %v32
    %v51 = vpop.permute.xlu0 %50
    %54 = vset.pattern.permute.xlu0 0
    %55 = vperm.xlu0 %54, %v33
    %v56 = vpop.permute.xlu0 %55
    %59 = vset.pattern.permute.xlu0 0
    %60 = vperm.xlu0 %59, %v34
    %v61 = vpop.permute.xlu0 %60
    %64 = vset.pattern.permute.xlu0 0
    %65 = vperm.xlu0 %64, %v35
    %v66 = vpop.permute.xlu0 %65
    %69 = vset.pattern.permute.xlu0 0
    %70 = vperm.xlu0 %69, %v36
    %v71 = vpop.permute.xlu0 %70
    %74 = vset.pattern.permute.xlu0 0
    %75 = vperm.xlu0 %74, %v37
    %v76 = vpop.permute.xlu0 %75
    %v78 = vperm.slane %v21, 0
    %v79 = vmul.f32 %v41, %v78
    %v80 = vmul.f32 %v46, %v78
    %v81 = vmul.f32 %v51, %v78
    %v82 = vmul.f32 %v56, %v78
    %v83 = vmul.f32 %v61, %v78
    %v84 = vmul.f32 %v66, %v78
    %v85 = vmul.f32 %v71, %v78
    %v86 = vmul.f32 %v76, %v78
    %87 = vset.pattern.permute.xlu0 1
    %88 = vperm.xlu0 %87, %v30
    %v89 = vpop.permute.xlu0 %88
    %91 = vset.pattern.permute.xlu0 1
    %92 = vperm.xlu0 %91, %v31
    %v93 = vpop.permute.xlu0 %92
    %95 = vset.pattern.permute.xlu0 1
    %96 = vperm.xlu0 %95, %v32
    %v97 = vpop.permute.xlu0 %96
    %99 = vset.pattern.permute.xlu0 1
    %100 = vperm.xlu0 %99, %v33
    %v101 = vpop.permute.xlu0 %100
    %103 = vset.pattern.permute.xlu0 1
    %104 = vperm.xlu0 %103, %v34
    %v105 = vpop.permute.xlu0 %104
    %107 = vset.pattern.permute.xlu0 1
    %108 = vperm.xlu0 %107, %v35
    %v109 = vpop.permute.xlu0 %108
    %111 = vset.pattern.permute.xlu0 1
    %112 = vperm.xlu0 %111, %v36
    %v113 = vpop.permute.xlu0 %112
    %115 = vset.pattern.permute.xlu0 1
    %116 = vperm.xlu0 %115, %v37
    %v117 = vpop.permute.xlu0 %116
    %v119 = vperm.slane %v21, 1
    %v120 = vmul.f32 %v89, %v119
    %v121 = vmul.f32 %v93, %v119
    %v122 = vmul.f32 %v97, %v119
    %v123 = vmul.f32 %v101, %v119
    %v124 = vmul.f32 %v105, %v119
    %v125 = vmul.f32 %v109, %v119
    %v126 = vmul.f32 %v113, %v119
    %v127 = vmul.f32 %v117, %v119
    %v128 = vadd.f32 %v79, %v120
    %v129 = vadd.f32 %v80, %v121
    %v130 = vadd.f32 %v81, %v122
    %v131 = vadd.f32 %v82, %v123
    %v132 = vadd.f32 %v83, %v124
    %v133 = vadd.f32 %v84, %v125
    %v134 = vadd.f32 %v85, %v126
    %v135 = vadd.f32 %v86, %v127
    %136 = vset.pattern.permute.xlu0 2
    %137 = vperm.xlu0 %136, %v30
    %v138 = vpop.permute.xlu0 %137
    %140 = vset.pattern.permute.xlu0 2
    %141 = vperm.xlu0 %140, %v31
    %v142 = vpop.permute.xlu0 %141
    %144 = vset.pattern.permute.xlu0 2
    %145 = vperm.xlu0 %144, %v32
    %v146 = vpop.permute.xlu0 %145
    %148 = vset.pattern.permute.xlu0 2
    %149 = vperm.xlu0 %148, %v33
    %v150 = vpop.permute.xlu0 %149
    %152 = vset.pattern.permute.xlu0 2
    %153 = vperm.xlu0 %152, %v34
    %v154 = vpop.permute.xlu0 %153
    %156 = vset.pattern.permute.xlu0 2
    %157 = vperm.xlu0 %156, %v35
    %v158 = vpop.permute.xlu0 %157
    %160 = vset.pattern.permute.xlu0 2
    %161 = vperm.xlu0 %160, %v36
    %v162 = vpop.permute.xlu0 %161
    %164 = vset.pattern.permute.xlu0 2
    %165 = vperm.xlu0 %164, %v37
    %v166 = vpop.permute.xlu0 %165
    %v168 = vperm.slane %v21, 2
    %v169 = vmul.f32 %v138, %v168
    %v170 = vmul.f32 %v142, %v168
    %v171 = vmul.f32 %v146, %v168
    %v172 = vmul.f32 %v150, %v168
    %v173 = vmul.f32 %v154, %v168
    %v174 = vmul.f32 %v158, %v168
    %v175 = vmul.f32 %v162, %v168
    %v176 = vmul.f32 %v166, %v168
    %v177 = vadd.f32 %v128, %v169
    %v178 = vadd.f32 %v129, %v170
    %v179 = vadd.f32 %v130, %v171
    %v180 = vadd.f32 %v131, %v172
    %v181 = vadd.f32 %v132, %v173
    %v182 = vadd.f32 %v133, %v174
    %v183 = vadd.f32 %v134, %v175
    %v184 = vadd.f32 %v135, %v176
    %185 = vset.pattern.permute.xlu0 3
    %186 = vperm.xlu0 %185, %v30
    %v187 = vpop.permute.xlu0 %186
    %189 = vset.pattern.permute.xlu0 3
    %190 = vperm.xlu0 %189, %v31
    %v191 = vpop.permute.xlu0 %190
    %193 = vset.pattern.permute.xlu0 3
    %194 = vperm.xlu0 %193, %v32
    %v195 = vpop.permute.xlu0 %194
    %197 = vset.pattern.permute.xlu0 3
    %198 = vperm.xlu0 %197, %v33
    %v199 = vpop.permute.xlu0 %198
    %201 = vset.pattern.permute.xlu0 3
    %202 = vperm.xlu0 %201, %v34
    %v203 = vpop.permute.xlu0 %202
    %205 = vset.pattern.permute.xlu0 3
    %206 = vperm.xlu0 %205, %v35
    %v207 = vpop.permute.xlu0 %206
    %209 = vset.pattern.permute.xlu0 3
    %210 = vperm.xlu0 %209, %v36
    %v211 = vpop.permute.xlu0 %210
    %213 = vset.pattern.permute.xlu0 3
    %214 = vperm.xlu0 %213, %v37
    %v215 = vpop.permute.xlu0 %214
    %v217 = vperm.slane %v21, 3
    %v218 = vmul.f32 %v187, %v217
    %v219 = vmul.f32 %v191, %v217
    %v220 = vmul.f32 %v195, %v217
    %v221 = vmul.f32 %v199, %v217
    %v222 = vmul.f32 %v203, %v217
    %v223 = vmul.f32 %v207, %v217
    %v224 = vmul.f32 %v211, %v217
    %v225 = vmul.f32 %v215, %v217
    %v226 = vadd.f32 %v177, %v218
    %v227 = vadd.f32 %v178, %v219
    %v228 = vadd.f32 %v179, %v220
    %v229 = vadd.f32 %v180, %v221
    %v230 = vadd.f32 %v181, %v222
    %v231 = vadd.f32 %v182, %v223
    %v232 = vadd.f32 %v183, %v224
    %v233 = vadd.f32 %v184, %v225
    %235 = vset.pattern.permute.xlu0 0
    %236 = vperm.xlu0 %235, %v22
    %v237 = vpop.permute.xlu0 %236
    %240 = vset.pattern.permute.xlu0 0
    %241 = vperm.xlu0 %240, %v23
    %v242 = vpop.permute.xlu0 %241
    %245 = vset.pattern.permute.xlu0 0
    %246 = vperm.xlu0 %245, %v24
    %v247 = vpop.permute.xlu0 %246
    %250 = vset.pattern.permute.xlu0 0
    %251 = vperm.xlu0 %250, %v25
    %v252 = vpop.permute.xlu0 %251
    %255 = vset.pattern.permute.xlu0 0
    %256 = vperm.xlu0 %255, %v26
    %v257 = vpop.permute.xlu0 %256
    %260 = vset.pattern.permute.xlu0 0
    %261 = vperm.xlu0 %260, %v27
    %v262 = vpop.permute.xlu0 %261
    %265 = vset.pattern.permute.xlu0 0
    %266 = vperm.xlu0 %265, %v28
    %v267 = vpop.permute.xlu0 %266
    %270 = vset.pattern.permute.xlu0 0
    %271 = vperm.xlu0 %270, %v29
    %v272 = vpop.permute.xlu0 %271
    %v274 = vadd.f32 %v226, %v237
    %v275 = vadd.f32 %v227, %v242
    %v276 = vadd.f32 %v228, %v247
    %v277 = vadd.f32 %v229, %v252
    %v278 = vadd.f32 %v230, %v257
    %v279 = vadd.f32 %v231, %v262
    %v280 = vadd.f32 %v232, %v267
    %v281 = vadd.f32 %v233, %v272
    %v282 = vmax.f32 %v274, 0.0
    %v283 = vmax.f32 %v275, 0.0
    %v284 = vmax.f32 %v276, 0.0
    %v285 = vmax.f32 %v277, 0.0
    %v286 = vmax.f32 %v278, 0.0
    %v287 = vmax.f32 %v279, 0.0
    %v288 = vmax.f32 %v280, 0.0
    %v289 = vmax.f32 %v281, 0.0
    %v290 = vld [vmem:[%s2] sm:$0xff]
    %v291 = vld [vmem:[%s2 + $0x8] sm:$0xff]
    %v292 = vld [vmem:[%s2 + $0x10] sm:$0xff]
    %v293 = vld [vmem:[%s2 + $0x18] sm:$0xff]
    %v294 = vld [vmem:[%s2 + $0x20] sm:$0xff]
    %v295 = vld [vmem:[%s2 + $0x28] sm:$0xff]
    %v296 = vld [vmem:[%s2 + $0x30] sm:$0xff]
    %v297 = vld [vmem:[%s2 + $0x38] sm:$0xff]
    %298 = vset.pattern.permute.xlu0 1
    %299 = vperm.xlu0 %298, %v22
    %v300 = vpop.permute.xlu0 %299
    %302 = vset.pattern.permute.xlu0 1
    %303 = vperm.xlu0 %302, %v23
    %v304 = vpop.permute.xlu0 %303
    %306 = vset.pattern.permute.xlu0 1
    %307 = vperm.xlu0 %306, %v24
    %v308 = vpop.permute.xlu0 %307
    %310 = vset.pattern.permute.xlu0 1
    %311 = vperm.xlu0 %310, %v25
    %v312 = vpop.permute.xlu0 %311
    %314 = vset.pattern.permute.xlu0 1
    %315 = vperm.xlu0 %314, %v26
    %v316 = vpop.permute.xlu0 %315
    %318 = vset.pattern.permute.xlu0 1
    %319 = vperm.xlu0 %318, %v27
    %v320 = vpop.permute.xlu0 %319
    %322 = vset.pattern.permute.xlu0 1
    %323 = vperm.xlu0 %322, %v28
    %v324 = vpop.permute.xlu0 %323
    %326 = vset.pattern.permute.xlu0 1
    %327 = vperm.xlu0 %326, %v29
    %v328 = vpop.permute.xlu0 %327
    %vm330 = vcmask 523264
    %v332 = vsel %vm330, %v290, 0
    %v335 = vsel %vm330, %v291, 0
    %v338 = vsel %vm330, %v292, 0
    %v341 = vsel %vm330, %v293, 0
    %v344 = vsel %vm330, %v294, 0
    %v347 = vsel %vm330, %v295, 0
    %v350 = vsel %vm330, %v296, 0
    %v353 = vsel %vm330, %v297, 0
    %355 = vmatpush.msra.mxu0 0.0
    %356 = vmatpush.msra.mxu0 0.0
    %357 = vmatpush.msra.mxu0 0.0
    %358 = vmatpush.msra.mxu0 0.0
    %359 = vmatpush.msra.mxu0 0.0
    %360 = vmatpush.msra.mxu0 0.0
    %361 = vmatpush.msra.mxu0 0.0
    %362 = vmatpush.msra.mxu0 0.0
    %363 = vmatpush.msra.mxu0 %v289
    %364 = vmatpush.msra.mxu0 %v288
    %365 = vmatpush.msra.mxu0 %v287
    %366 = vmatpush.msra.mxu0 %v286
    %367 = vmatpush.msra.mxu0 %v285
    %368 = vmatpush.msra.mxu0 %v284
    %369 = vmatpush.msra.mxu0 %v283
    %370 = vmatpush.msra.mxu0 %v282
    %371 = vmatmul.f32.gmra.mxu0 %v332
    %v372 = vpop.f32.mrf.mxu0
    %v373 = vadd.f32 %v300, %v372
    %374 = vmatmul.f32.gmra.mxu0 %v335
    %v375 = vpop.f32.mrf.mxu0
    %v376 = vadd.f32 %v304, %v375
    %377 = vmatmul.f32.gmra.mxu0 %v338
    %v378 = vpop.f32.mrf.mxu0
    %v379 = vadd.f32 %v308, %v378
    %380 = vmatmul.f32.gmra.mxu0 %v341
    %v381 = vpop.f32.mrf.mxu0
    %v382 = vadd.f32 %v312, %v381
    %383 = vmatmul.f32.gmra.mxu0 %v344
    %v384 = vpop.f32.mrf.mxu0
    %v385 = vadd.f32 %v316, %v384
    %386 = vmatmul.f32.gmra.mxu0 %v347
    %v387 = vpop.f32.mrf.mxu0
    %v388 = vadd.f32 %v320, %v387
    %389 = vmatmul.f32.gmra.mxu0 %v350
    %v390 = vpop.f32.mrf.mxu0
    %v391 = vadd.f32 %v324, %v390
    %392 = vmatmul.f32.gmra.mxu0 %v353
    %v393 = vpop.f32.mrf.mxu0
    %v394 = vadd.f32 %v328, %v393
    %395 = vdwg.mxu0
    %v396 = vmax.f32 %v373, 0.0
    %v397 = vmax.f32 %v376, 0.0
    %v398 = vmax.f32 %v379, 0.0
    %v399 = vmax.f32 %v382, 0.0
    %v400 = vmax.f32 %v385, 0.0
    %v401 = vmax.f32 %v388, 0.0
    %v402 = vmax.f32 %v391, 0.0
    %v403 = vmax.f32 %v394, 0.0
    %v404 = vld [vmem:[%s3] sm:$0xff]
    %405 = vset.pattern.permute.xlu0 2
    %406 = vperm.xlu0 %405, %v22
    %v407 = vpop.permute.xlu0 %406
    %v410 = vsel %vm330, %v404, 0
    %412 = vmatpush.msra.mxu0 0.0
    %413 = vmatpush.msra.mxu0 0.0
    %414 = vmatpush.msra.mxu0 0.0
    %415 = vmatpush.msra.mxu0 0.0
    %416 = vmatpush.msra.mxu0 0.0
    %417 = vmatpush.msra.mxu0 0.0
    %418 = vmatpush.msra.mxu0 0.0
    %419 = vmatpush.msra.mxu0 0.0
    %420 = vmatpush.msra.mxu0 %v403
    %421 = vmatpush.msra.mxu0 %v402
    %422 = vmatpush.msra.mxu0 %v401
    %423 = vmatpush.msra.mxu0 %v400
    %424 = vmatpush.msra.mxu0 %v399
    %425 = vmatpush.msra.mxu0 %v398
    %426 = vmatpush.msra.mxu0 %v397
    %427 = vmatpush.msra.mxu0 %v396
    %428 = vmatmul.f32.gmra.mxu0 %v410
    %v429 = vpop.f32.mrf.mxu0
    %v430 = vadd.f32 %v407, %v429
    %431 = vdwg.mxu0
    %v432 = vlaneseq
    %v433 = vshrl.u32 %v432, 7
    %vm434 = vcmp.lt.s32.totalorder %v433, 2
    %v435 = vsel %vm434, %v430, -inf
    %v436 = vrot.slane %v435, 4
    %v437 = vmax.f32 %v435, %v436
    %v438 = vrot.slane %v437, 2
    %v439 = vmax.f32 %v437, %v438
    %v440 = vrot.slane %v439, 1
    %v441 = vmax.f32 %v439, %v440
    %v442 = vsub.f32 %v435, %v441
    %v443 = vmul.f32 %v442, 1.442695
    %v444 = vpow.pop %v443
    %v445 = vrot.slane %v444, 4
    %v446 = vadd.f32 %v444, %v445
    %v447 = vrot.slane %v446, 2
    %v448 = vadd.f32 %v446, %v447
    %v449 = vrot.slane %v448, 1
    %v450 = vadd.f32 %v448, %v449
    %v451 = vrcp.pop %v450
    %v452 = vmul.f32 %v450, %v451
    %v453 = vsub.f32 1.0, %v452
    %v454 = vmul.f32 %v451, %v453
    %v455 = vadd.f32 %v451, %v454
    %vm456 = vweird.f32 %v450
    %vm457 = vweird.f32 %v451
    %vm458 = vmor %vm456, %vm457
    %v459 = vsel %vm458, %v451, %v455
    %v460 = vand.u32 2147483647, %v450
    %vm461 = vcmp.eq.f32.partialorder %v460, 8.507059e+37
    %v462 = vand.u32 %v450, 2147483648
    %v463 = vor.u32 1.1754944e-38, %v462
    %v464 = vsel %vm461, %v463, %v459
    %v465 = vmul.f32 1.0, %v464
    %v466 = vmul.f32 %v444, %v465
    %vm467 = vcmp.eq.s32.totalorder %v433, 2
    %v468 = vsel %vm467, %v430, 0.0
    %v469 = vsel %vm434, %v466, %v468
    %470 = vst [vmem:[#allocation2] sm:$0xff] %v469
    // Predicated region
    $region22: #{tpu_custom_call.1} parent=1 // pred_check
      _
    $region23: #{tpu_custom_call.1} parent=1 // pred_check_branch
      %472 = sbr.rel (0) target = $region25
    $region24: #{tpu_custom_call.1} parent=1 // pred_region
      %474 = vsyncadd [#allocation3], 0
      %s476 = sshll.u32 [#allocation2], 4
      %s477 = int_to_ptr.vmem [resolvable:$true] %s476
      %s478 = sshll.u32 %s5, 4
      %s479 = int_to_ptr.hbm [resolvable:$true] %s478
      %481 = dma.vmem_to_hbm [thread:$0]  %s477, 128, %s479, [#allocation3]
    $region25: #{tpu_custom_call.1} parent=1 // pred_fallthru
      _
    // Predicated region
    $region26: #{tpu_custom_call.1} parent=1 // pred_check
      _
    $region27: #{tpu_custom_call.1} parent=1 // pred_check_branch
      %483 = sbr.rel (0) target = $region29
    $region28: #{tpu_custom_call.1} parent=1 // pred_region
      %485 = dma.done [#allocation3], 128
    $region29: #{tpu_custom_call.1} parent=1 // pred_fallthru
      _
    %486 = vsyncpa [#allocation3], 1

</llo_original>
